<compile_context>
chip_gen: v6e
topology: v6e:2x2x1
jax: 0.10.0
libtpu: 0.0.40
codegen_flags: <defaults>
</compile_context>

<pallas_src>
import jax
import jax.numpy as jnp
from jax.experimental import pallas as pl
from jax.experimental.pallas import tpu as pltpu

LANE = 128


def _round_up(n, m):
    return ((n + m - 1) // m) * m


def mlp1sig_kernel(x_ref, w1t_ref, b1_ref, w2t_ref, b2_ref, o_ref):
    # x_ref:   (block_b, Dp)  f32
    # w1t_ref: (Dp, Ip)       bf16     b1_ref: (1, Ip) f32
    # w2t_ref: (Ip, Cp)       bf16     b2_ref: (1, Cp) f32
    # o_ref:   (block_b, Cp)  f32  (lane-dense: Cp is a multiple of 128)
    x = x_ref[...]
    # fc1 on the MXU: bf16 operands, f32 accumulation.
    h = jnp.dot(x.astype(jnp.bfloat16), w1t_ref[...],
                preferred_element_type=jnp.float32)
    # Bias + sigmoid in f32 (VPU add + EUP exp).
    h = jax.nn.sigmoid(h + b1_ref[...])
    # fc2 on the MXU.
    out = jnp.dot(h.astype(jnp.bfloat16), w2t_ref[...],
                  preferred_element_type=jnp.float32)
    o_ref[...] = (out + b2_ref[...]).astype(o_ref.dtype)


def mlp1sig_forward(x, w1, b1, w2, b2, *, block_b=128):
    """Forward pass of MLP1sig.

    x:  (B, input_size) f32
    w1: (inter, input_size), b1: (inter,)      -- PyTorch nn.Linear layout
    w2: (num_classes, inter), b2: (num_classes,)
    Returns (B, num_classes) f32.
    """
    B, D = x.shape
    inter = w1.shape[0]
    C = w2.shape[0]

    # Lane-dense padded dims.
    Dp = _round_up(D, LANE)
    Ip = _round_up(inter, LANE)
    Cp = _round_up(C, LANE)

    # Batch tiling: cap block_b for tiny batches, pad B up to a multiple of it.
    block_b = min(block_b, _round_up(B, 8))
    Bp = _round_up(B, block_b)
    grid = (Bp // block_b,)

    f32 = jnp.float32
    bf16 = jnp.bfloat16

    # Zero-padded, pre-transposed operands (padding contributes exact zeros to
    # the valid outputs: padded x cols hit zero W1^T rows; padded hidden units
    # hit zero W2^T rows).
    x_pad = jnp.zeros((Bp, Dp), f32).at[:B, :D].set(x.astype(f32))
    w1t = jnp.zeros((Dp, Ip), bf16).at[:D, :inter].set(w1.T.astype(bf16))
    w2t = jnp.zeros((Ip, Cp), bf16).at[:inter, :C].set(w2.T.astype(bf16))
    b1p = jnp.zeros((1, Ip), f32).at[0, :inter].set(b1.astype(f32))
    b2p = jnp.zeros((1, Cp), f32).at[0, :C].set(b2.astype(f32))

    # Advisory cost estimate for XLA's scheduler.
    cost = pl.CostEstimate(
        flops=2 * Bp * Dp * Ip + 2 * Bp * Ip * Cp,
        transcendentals=Bp * Ip,
        bytes_accessed=(x_pad.size * 4 + w1t.size * 2 + w2t.size * 2
                        + b1p.size * 4 + b2p.size * 4 + Bp * Cp * 4),
    )

    # Explicit VMEM budget: double-buffered x/out tiles + resident weights,
    # with headroom; capped below v7x's 64 MiB physical VMEM.
    vmem_need = (2 * block_b * Dp * 4 + 2 * block_b * Cp * 4
                 + 2 * (Dp * Ip + Ip * Cp) * 2 + 2 * (Ip + Cp) * 4)
    vmem_limit = int(min(48 * 1024 * 1024,
                         max(32 * 1024 * 1024, 2 * vmem_need)))

    out_pad = pl.pallas_call(
        mlp1sig_kernel,
        out_shape=jax.ShapeDtypeStruct((Bp, Cp), f32),
        grid_spec=pltpu.PrefetchScalarGridSpec(
            num_scalar_prefetch=0,
            grid=grid,
            in_specs=[
                pl.BlockSpec((block_b, Dp), lambda i: (i, 0)),  # x tile
                pl.BlockSpec((Dp, Ip),      lambda i: (0, 0)),  # W1^T (resident)
                pl.BlockSpec((1, Ip),       lambda i: (0, 0)),  # b1
                pl.BlockSpec((Ip, Cp),      lambda i: (0, 0)),  # W2^T (resident)
                pl.BlockSpec((1, Cp),       lambda i: (0, 0)),  # b2
            ],
            out_specs=pl.BlockSpec((block_b, Cp), lambda i: (i, 0)),
        ),
        compiler_params=pltpu.CompilerParams(
            dimension_semantics=("parallel",),
            vmem_limit_bytes=vmem_limit,
        ),
        cost_estimate=cost,
    )(x_pad, w1t, b1p, w2t, b2p)

    return out_pad[:B, :C]


def init_params(key, input_size, inter, num_classes, dtype=jnp.float32):
    """PyTorch-style nn.Linear init: U(-1/sqrt(fan_in), 1/sqrt(fan_in))."""
    k1, k2, k3, k4 = jax.random.split(key, 4)
    bound1 = 1.0 / (input_size ** 0.5)
    bound2 = 1.0 / (inter ** 0.5)
    w1 = jax.random.uniform(k1, (inter, input_size), dtype, -bound1, bound1)
    b1 = jax.random.uniform(k2, (inter,),            dtype, -bound1, bound1)
    w2 = jax.random.uniform(k3, (num_classes, inter), dtype, -bound2, bound2)
    b2 = jax.random.uniform(k4, (num_classes,),       dtype, -bound2, bound2)
    return w1, b1, w2, b2


if __name__ == "__main__":
    batch, input_size, inter, num_classes = 256, 64, 32, 10

    key = jax.random.PRNGKey(0)
    kx, kp = jax.random.split(key)
    x = jax.random.normal(kx, (batch, input_size), jnp.float32)
    w1, b1, w2, b2 = init_params(kp, input_size, inter, num_classes)

    out = mlp1sig_forward(x, w1, b1, w2, b2, block_b=128)
    out = jax.block_until_ready(out)
    assert out.shape == (batch, num_classes)

    # Reference 1: matched-precision (bf16 matmul operands, f32 accumulation).
    bf16 = jnp.bfloat16
    h_ref = jax.nn.sigmoid(
        jnp.dot(x.astype(bf16), w1.T.astype(bf16),
                preferred_element_type=jnp.float32) + b1)
    ref_bf16 = jnp.dot(h_ref.astype(bf16), w2.T.astype(bf16),
                       preferred_element_type=jnp.float32) + b2
    assert jnp.allclose(out, ref_bf16, atol=1e-3, rtol=1e-3), \
        "mismatch vs matched-precision reference"

    # Reference 2: full f32 reference (loose tolerance for bf16 matmul error).
    ref_f32 = jax.nn.sigmoid(x @ w1.T + b1) @ w2.T + b2
    assert jnp.allclose(out, ref_f32, atol=3e-2, rtol=3e-2), \
        "mismatch vs f32 reference"

    print("KERNEL_OK")
</pallas_src>

<mosaic_0001>
module attributes {stable_mosaic.version = 11 : i64} {
  func.func @mlp1sig_kernel(%arg0: i32, %arg1: memref<128x128xf32, #tpu.memory_space<vmem>>, %arg2: memref<128x128xbf16, #tpu.memory_space<vmem>>, %arg3: memref<1x128xf32, #tpu.memory_space<vmem>>, %arg4: memref<128x128xbf16, #tpu.memory_space<vmem>>, %arg5: memref<1x128xf32, #tpu.memory_space<vmem>>, %arg6: memref<128x128xf32, #tpu.memory_space<vmem>>) attributes {dimension_semantics = [#tpu.dimension_semantics<parallel>], iteration_bounds = array<i64: 2>, scalar_prefetch = 0 : i64, scratch_operands = 0 : i64, tpu.core_type = #tpu.core_type<tc>, window_params = [{transform_indices = @transform_0, window_bounds = array<i64: 128, 128>}, {pipeline_mode = #tpu.pipeline_mode<synchronous>, transform_indices = @transform_1, window_bounds = array<i64: 128, 128>}, {pipeline_mode = #tpu.pipeline_mode<synchronous>, transform_indices = @transform_2, window_bounds = array<i64: 1, 128>}, {pipeline_mode = #tpu.pipeline_mode<synchronous>, transform_indices = @transform_3, window_bounds = array<i64: 128, 128>}, {pipeline_mode = #tpu.pipeline_mode<synchronous>, transform_indices = @transform_4, window_bounds = array<i64: 1, 128>}, {transform_indices = @transform_5, window_bounds = array<i64: 128, 128>}]} {
    %c0 = arith.constant 0 : index
    %c0_0 = arith.constant 0 : index
    %0 = vector.load %arg1[%c0, %c0_0] : memref<128x128xf32, #tpu.memory_space<vmem>>, vector<128x128xf32>
    %1 = arith.truncf %0 : vector<128x128xf32> to vector<128x128xbf16>
    %c0_1 = arith.constant 0 : index
    %c0_2 = arith.constant 0 : index
    %2 = vector.load %arg2[%c0_1, %c0_2] : memref<128x128xbf16, #tpu.memory_space<vmem>>, vector<128x128xbf16>
    %cst = arith.constant dense<0.000000e+00> : vector<128x128xf32>
    %3 = tpu.matmul %1, %2, %cst {dimension_numbers = #tpu.dot_dimension_numbers<[1], [0], [0], [1], [0, 0, 1, 1], [], []>} : vector<128x128xbf16>, vector<128x128xbf16>, vector<128x128xf32> -> vector<128x128xf32>
    %c0_3 = arith.constant 0 : index
    %c0_4 = arith.constant 0 : index
    %4 = vector.load %arg3[%c0_3, %c0_4] : memref<1x128xf32, #tpu.memory_space<vmem>>, vector<1x128xf32>
    %5 = vector.broadcast %4 : vector<1x128xf32> to vector<128x128xf32>
    %6 = arith.addf %3, %5 : vector<128x128xf32>
    %7 = arith.negf %6 : vector<128x128xf32>
    %8 = math.exp %7 : vector<128x128xf32>
    %cst_5 = arith.constant 1.000000e+00 : f32
    %9 = vector.broadcast %cst_5 : f32 to vector<128x128xf32>
    %10 = arith.addf %9, %8 : vector<128x128xf32>
    %11 = arith.divf %9, %10 : vector<128x128xf32>
    %12 = arith.truncf %11 : vector<128x128xf32> to vector<128x128xbf16>
    %c0_6 = arith.constant 0 : index
    %c0_7 = arith.constant 0 : index
    %13 = vector.load %arg4[%c0_6, %c0_7] : memref<128x128xbf16, #tpu.memory_space<vmem>>, vector<128x128xbf16>
    %cst_8 = arith.constant dense<0.000000e+00> : vector<128x128xf32>
    %14 = tpu.matmul %12, %13, %cst_8 {dimension_numbers = #tpu.dot_dimension_numbers<[1], [0], [0], [1], [0, 0, 1, 1], [], []>} : vector<128x128xbf16>, vector<128x128xbf16>, vector<128x128xf32> -> vector<128x128xf32>
    %c0_9 = arith.constant 0 : index
    %c0_10 = arith.constant 0 : index
    %15 = vector.load %arg5[%c0_9, %c0_10] : memref<1x128xf32, #tpu.memory_space<vmem>>, vector<1x128xf32>
    %16 = vector.broadcast %15 : vector<1x128xf32> to vector<128x128xf32>
    %17 = arith.addf %14, %16 : vector<128x128xf32>
    %c0_11 = arith.constant 0 : index
    %c0_12 = arith.constant 0 : index
    %18 = vector.load %arg6[%c0_11, %c0_12] : memref<128x128xf32, #tpu.memory_space<vmem>>, vector<128x128xf32>
    tpu.vector_store %arg6[%c0_11, %c0_12], %17 {strides = array<i32>} : memref<128x128xf32, #tpu.memory_space<vmem>>, vector<128x128xf32>,
    return
  }
  func.func @transform_0(%arg0: i32) -> (i32, i32) {
    %c0_i32 = arith.constant 0 : i32
    %c0_i32_0 = arith.constant 0 : i32
    return %arg0, %c0_i32 : i32, i32
  }
  func.func @transform_1(%arg0: i32) -> (i32, i32) {
    %c0_i32 = arith.constant 0 : i32
    %c0_i32_0 = arith.constant 0 : i32
    %c0_i32_1 = arith.constant 0 : i32
    return %c0_i32, %c0_i32_0 : i32, i32
  }
  func.func @transform_2(%arg0: i32) -> (i32, i32) {
    %c0_i32 = arith.constant 0 : i32
    %c0_i32_0 = arith.constant 0 : i32
    %c0_i32_1 = arith.constant 0 : i32
    return %c0_i32, %c0_i32_0 : i32, i32
  }
  func.func @transform_3(%arg0: i32) -> (i32, i32) {
    %c0_i32 = arith.constant 0 : i32
    %c0_i32_0 = arith.constant 0 : i32
    %c0_i32_1 = arith.constant 0 : i32
    return %c0_i32, %c0_i32_0 : i32, i32
  }
  func.func @transform_4(%arg0: i32) -> (i32, i32) {
    %c0_i32 = arith.constant 0 : i32
    %c0_i32_0 = arith.constant 0 : i32
    %c0_i32_1 = arith.constant 0 : i32
    return %c0_i32, %c0_i32_0 : i32, i32
  }
  func.func @transform_5(%arg0: i32) -> (i32, i32) {
    %c0_i32 = arith.constant 0 : i32
    %c0_i32_0 = arith.constant 0 : i32
    return %arg0, %c0_i32 : i32, i32
  }
}

</mosaic_0001>

<llo_original>
// kernel: tpu_custom_call.1
$region0: #{tpu_custom_call.1}
  #allocation0 [shape = 'u32[]', space=smem, size = 0x4, offset = 0x4, fixed_abs, tag = 'smem constant byte address 0x4 - core index']
  #allocation1 [shape = 'u32[144,128]{1,0:T(1,128)}', space=vmem, size = 0x12000, scoped, tag = 'internal scratch']
  %s0 = inlined_call_operand.hbm [shape: f32[256,128], index: 0, kind: input, shape index: {}]
  %s1 = inlined_call_operand.hbm [shape: bf16[128,128], index: 1, kind: input, shape index: {}]
  %s2 = inlined_call_operand.vmem [shape: f32[1,128], index: 2, kind: input, shape index: {}]
  %s3 = inlined_call_operand.hbm [shape: bf16[128,128], index: 3, kind: input, shape index: {}]
  %s4 = inlined_call_operand.vmem [shape: f32[1,128], index: 4, kind: input, shape index: {}]
  %s5 = inlined_call_operand.hbm [shape: f32[256,128], index: 5, kind: output, shape index: {}]
  %s6 = sld [smem:[#allocation0]]
  $region65: #{tpu_custom_call.1} parent=0
    _
  %s8 = ssub.s32 1, %s6
  %s9 = scalar_select 0, %s8, %s6
  $region1: #{tpu_custom_call.1} parent=0
    #allocation2 [shape = 'u8[131072]{0}', space=vmem, size = 0x20000, scoped, tag = 'input window, operand 0']
    #allocation3 [shape = 's32[2]{0}', space=sflag, size = 0x8, scoped, tag = 'scoped memory for tpu_custom_call.1']
    #allocation4 [shape = 's32[2]{0}', space=sflag, size = 0x8, scoped, tag = 'scoped memory for tpu_custom_call.1']
    #allocation5 [shape = 'u8[32768]{0}', space=vmem, size = 0x8000, scoped, tag = 'input window, operand 1, single buffered']
    #allocation6 [shape = 's32[1]{0}', space=sflag, size = 0x4, scoped, tag = 'scoped memory for tpu_custom_call.1']
    #allocation7 [shape = 'u8[32768]{0}', space=vmem, size = 0x8000, scoped, tag = 'input window, operand 3, single buffered']
    #allocation8 [shape = 'u8[131072]{0}', space=vmem, size = 0x20000, scoped, tag = 'output window, operand 0']
    %10 = vsyncpa [#allocation3], 0
    %s11 = scalar_lea.sflag [#allocation3], 1
    %12 = vsyncpa %s11, 0
    %13 = vsyncpa [#allocation6], 0
    %14 = vsyncpa [#allocation4], 0
    %s15 = scalar_lea.sflag [#allocation4], 1
    %16 = vsyncpa %s15, 0
    loop: start=0, step=1, limit=4
    $region2: #{tpu_custom_call.1} parent=1 // loop_pre_header
      _
    $region3: #{tpu_custom_call.1} parent=1 // loop_header
      %s18 = sphi 0, %s22
      %p19 = scmp.ge.s32.totalorder %s18, 4
      %s28 = sphi 0, %s30
      %s31 = sphi 0, %s28
      %s32 = sphi 0, %s31
      %s48 = sphi 0, %s32
      %s52 = sphi 0, %s52
      %s54 = sphi 0, %s52
      %s55 = sphi 0, %s54
      %s69 = sphi 0, %s55
      %s73 = sphi 0, %s73
      %s75 = sphi 0, %s73
      %s76 = sphi 0, %s75
      %s90 = sphi 0, %s76
      %s94 = sphi 0, %s94
      %s96 = sphi 0, %s94
      %s97 = sphi 0, %s96
      %s111 = sphi 0, %s97
      %s115 = sphi 0, %s115
      %s117 = sphi 0, %s115
      %s118 = sphi 0, %s117
      %s132 = sphi 0, %s118
      %s138 = sphi 0, %s140
      %s141 = sphi 0, %s138
      %s142 = sphi 0, %s141
      %s158 = sphi 0, %s142
    $region4: #{tpu_custom_call.1} parent=1 // loop_header_branch
      %21 = sbr.rel (%p19) target = $region8
    $region5: #{tpu_custom_call.1} parent=1 // loop_body
      %s23 = ssub.s32 %s18, 1
      %s24 = ssub.s32 %s18, 2
      %s25 = sadd.s32 %s18, 1
      %s26 = ssub.s32 %s18, %s25
      %p27 = scmp.eq.s32.totalorder %s26, 0
      %s29 = sadd.s32 %s28, 1
      %s30 = scalar_select %p27, %s28, %s29
      %p33 = pneg %p27
      %p34 = scmp.eq.s32.totalorder %s18, 1
      %p35 = por %p33, %p34
      %p36 = scmp.ne.s32.totalorder %s28, %s31
      %p37 = scmp.eq.s32.totalorder %s18, 0
      %p38 = por %p36, %p37
      %p39 = scmp.ne.s32.totalorder %s28, %s31
      %p40 = scmp.eq.s32.totalorder %s23, 1
      %p41 = por %p39, %p40
      %p42 = scmp.ne.s32.totalorder %s31, %s32
      %p43 = scmp.eq.s32.totalorder %s23, 0
      %p44 = por %p42, %p43
      %p45 = scmp.ne.s32.totalorder %s31, %s32
      %p46 = scmp.eq.s32.totalorder %s24, 1
      %p47 = por %p45, %p46
      %p49 = scmp.ne.s32.totalorder %s32, %s48
      %p50 = scmp.eq.s32.totalorder %s24, 0
      %p51 = por %p49, %p50
      %s53 = sadd.s32 %s52, 1
      %p56 = scmp.eq.s32.totalorder %s18, 1
      %p57 = scmp.ne.s32.totalorder %s52, %s54
      %p58 = scmp.eq.s32.totalorder %s18, 0
      %p59 = por %p57, %p58
      %p60 = scmp.ne.s32.totalorder %s52, %s54
      %p61 = scmp.eq.s32.totalorder %s23, 1
      %p62 = por %p60, %p61
      %p63 = scmp.ne.s32.totalorder %s54, %s55
      %p64 = scmp.eq.s32.totalorder %s23, 0
      %p65 = por %p63, %p64
      %p66 = scmp.ne.s32.totalorder %s54, %s55
      %p67 = scmp.eq.s32.totalorder %s24, 1
      %p68 = por %p66, %p67
      %p70 = scmp.ne.s32.totalorder %s55, %s69
      %p71 = scmp.eq.s32.totalorder %s24, 0
      %p72 = por %p70, %p71
      %s74 = sadd.s32 %s73, 1
      %p77 = scmp.eq.s32.totalorder %s18, 1
      %p78 = scmp.ne.s32.totalorder %s73, %s75
      %p79 = scmp.eq.s32.totalorder %s18, 0
      %p80 = por %p78, %p79
      %p81 = scmp.ne.s32.totalorder %s73, %s75
      %p82 = scmp.eq.s32.totalorder %s23, 1
      %p83 = por %p81, %p82
      %p84 = scmp.ne.s32.totalorder %s75, %s76
      %p85 = scmp.eq.s32.totalorder %s23, 0
      %p86 = por %p84, %p85
      %p87 = scmp.ne.s32.totalorder %s75, %s76
      %p88 = scmp.eq.s32.totalorder %s24, 1
      %p89 = por %p87, %p88
      %p91 = scmp.ne.s32.totalorder %s76, %s90
      %p92 = scmp.eq.s32.totalorder %s24, 0
      %p93 = por %p91, %p92
      %s95 = sadd.s32 %s94, 1
      %p98 = scmp.eq.s32.totalorder %s18, 1
      %p99 = scmp.ne.s32.totalorder %s94, %s96
      %p100 = scmp.eq.s32.totalorder %s18, 0
      %p101 = por %p99, %p100
      %p102 = scmp.ne.s32.totalorder %s94, %s96
      %p103 = scmp.eq.s32.totalorder %s23, 1
      %p104 = por %p102, %p103
      %p105 = scmp.ne.s32.totalorder %s96, %s97
      %p106 = scmp.eq.s32.totalorder %s23, 0
      %p107 = por %p105, %p106
      %p108 = scmp.ne.s32.totalorder %s96, %s97
      %p109 = scmp.eq.s32.totalorder %s24, 1
      %p110 = por %p108, %p109
      %p112 = scmp.ne.s32.totalorder %s97, %s111
      %p113 = scmp.eq.s32.totalorder %s24, 0
      %p114 = por %p112, %p113
      %s116 = sadd.s32 %s115, 1
      %p119 = scmp.eq.s32.totalorder %s18, 1
      %p120 = scmp.ne.s32.totalorder %s115, %s117
      %p121 = scmp.eq.s32.totalorder %s18, 0
      %p122 = por %p120, %p121
      %p123 = scmp.ne.s32.totalorder %s115, %s117
      %p124 = scmp.eq.s32.totalorder %s23, 1
      %p125 = por %p123, %p124
      %p126 = scmp.ne.s32.totalorder %s117, %s118
      %p127 = scmp.eq.s32.totalorder %s23, 0
      %p128 = por %p126, %p127
      %p129 = scmp.ne.s32.totalorder %s117, %s118
      %p130 = scmp.eq.s32.totalorder %s24, 1
      %p131 = por %p129, %p130
      %p133 = scmp.ne.s32.totalorder %s118, %s132
      %p134 = scmp.eq.s32.totalorder %s24, 0
      %p135 = por %p133, %p134
      %s136 = ssub.s32 %s18, %s25
      %p137 = scmp.eq.s32.totalorder %s136, 0
      %s139 = sadd.s32 %s138, 1
      %s140 = scalar_select %p137, %s138, %s139
      %p143 = pneg %p137
      %p144 = scmp.eq.s32.totalorder %s18, 1
      %p145 = por %p143, %p144
      %p146 = scmp.ne.s32.totalorder %s138, %s141
      %p147 = scmp.eq.s32.totalorder %s18, 0
      %p148 = por %p146, %p147
      %p149 = scmp.ne.s32.totalorder %s138, %s141
      %p150 = scmp.eq.s32.totalorder %s23, 1
      %p151 = por %p149, %p150
      %p152 = scmp.ne.s32.totalorder %s141, %s142
      %p153 = scmp.eq.s32.totalorder %s23, 0
      %p154 = por %p152, %p153
      %p155 = scmp.ne.s32.totalorder %s141, %s142
      %p156 = scmp.eq.s32.totalorder %s24, 1
      %p157 = por %p155, %p156
      %p159 = scmp.ne.s32.totalorder %s142, %s158
      %p160 = scmp.eq.s32.totalorder %s24, 0
      %p161 = por %p159, %p160
      %p162 = scmp.le.s32.totalorder 1, %s18
      %p163 = scmp.lt.s32.totalorder %s18, 3
      %p164 = pnand %p162, %p163
      %p165 = pneg %p164
      // Predicated region
      $region9: #{tpu_custom_call.1} parent=5 // pred_check
        _
      $region10: #{tpu_custom_call.1} parent=5 // pred_check_branch
        %167 = sbr.rel (%p164) target = $region12
      $region11: #{tpu_custom_call.1} parent=5 // pred_region
        %s168 = ssub.s32 %s18, 1
        // Predicated region
        $region13: #{tpu_custom_call.1} parent=11 // pred_check
          %p169 = pneg %p65
        $region14: #{tpu_custom_call.1} parent=11 // pred_check_branch
          %171 = sbr.rel (%p169) target = $region16
        $region15: #{tpu_custom_call.1} parent=11 // pred_region
          %s173 = ssub.s32 1024, 1024
          %174 = vsyncadd [#allocation6], %s173
          %s175 = sshll.u32 [#allocation5], 4
          %s176 = int_to_ptr.vmem [resolvable:$true] %s175
          %181 = dma.hbm_to_vmem [thread:$0]  %s1, 1024, %s176, [#allocation6], 64, 64, 4
        $region16: #{tpu_custom_call.1} parent=11 // pred_fallthru
          _
        // Predicated region
        $region17: #{tpu_custom_call.1} parent=11 // pred_check
          %p182 = pneg %p86
        $region18: #{tpu_custom_call.1} parent=11 // pred_check_branch
          %184 = sbr.rel (%p182) target = $region20
        $region19: #{tpu_custom_call.1} parent=11 // pred_region
          _
        $region20: #{tpu_custom_call.1} parent=11 // pred_fallthru
          _
        // Predicated region
        $region21: #{tpu_custom_call.1} parent=11 // pred_check
          %p185 = pneg %p107
        $region22: #{tpu_custom_call.1} parent=11 // pred_check_branch
          %187 = sbr.rel (%p185) target = $region24
        $region23: #{tpu_custom_call.1} parent=11 // pred_region
          %s189 = ssub.s32 1024, 1024
          %190 = vsyncadd [#allocation6], %s189
          %s191 = sshll.u32 [#allocation7], 4
          %s192 = int_to_ptr.vmem [resolvable:$true] %s191
          %197 = dma.hbm_to_vmem [thread:$0]  %s3, 1024, %s192, [#allocation6], 64, 64, 4
        $region24: #{tpu_custom_call.1} parent=11 // pred_fallthru
          _
        // Predicated region
        $region25: #{tpu_custom_call.1} parent=11 // pred_check
          %p198 = pneg %p128
        $region26: #{tpu_custom_call.1} parent=11 // pred_check_branch
          %200 = sbr.rel (%p198) target = $region28
        $region27: #{tpu_custom_call.1} parent=11 // pred_region
          _
        $region28: #{tpu_custom_call.1} parent=11 // pred_fallthru
          _
      $region12: #{tpu_custom_call.1} parent=5 // pred_fallthru
        _
      %p201 = scmp.lt.s32.totalorder %s18, 2
      // Predicated region
      $region29: #{tpu_custom_call.1} parent=5 // pred_check
        %p202 = pneg %p201
      $region30: #{tpu_custom_call.1} parent=5 // pred_check_branch
        %204 = sbr.rel (%p202) target = $region32
      $region31: #{tpu_custom_call.1} parent=5 // pred_region
        // Predicated region
        $region33: #{tpu_custom_call.1} parent=31 // pred_check
          %p205 = pneg %p38
        $region34: #{tpu_custom_call.1} parent=31 // pred_check_branch
          %207 = sbr.rel (%p205) target = $region36
        $region35: #{tpu_custom_call.1} parent=31 // pred_region
          %s208 = sand.u32 %s28, 1
          %s209 = scalar_lea.sflag [#allocation3], %s208
          %s210 = sand.u32 %s28, 1
          %s211 = smul.addr %s210, 128
          %s212 = scalar_lea.vmem [#allocation2], %s211
          %s213 = smul.u32 16, %s18
          %s215 = ssub.s32 2048, 2048
          %216 = vsyncadd %s209, %s215
          %s217 = smul.addr %s213, 128
          %s218 = scalar_lea.hbm %s0, %s217
          %s219 = sshll.u32 %s212, 4
          %s220 = int_to_ptr.vmem [resolvable:$true] %s219
          %225 = dma.hbm_to_vmem [thread:$0]  %s218, 2048, %s220, %s209, 128, 128, 8
        $region36: #{tpu_custom_call.1} parent=31 // pred_fallthru
          _
      $region32: #{tpu_custom_call.1} parent=5 // pred_fallthru
        _
      %p226 = scmp.le.s32.totalorder 1, %s18
      %p227 = scmp.lt.s32.totalorder %s18, 3
      %p228 = pnand %p226, %p227
      %p229 = pneg %p228
      // Predicated region
      $region37: #{tpu_custom_call.1} parent=5 // pred_check
        _
      $region38: #{tpu_custom_call.1} parent=5 // pred_check_branch
        %231 = sbr.rel (%p228) target = $region40
      $region39: #{tpu_custom_call.1} parent=5 // pred_region
        %s232 = ssub.s32 %s18, 1
        %s233 = sand.u32 %s31, 1
        %s234 = scalar_lea.sflag [#allocation3], %s233
        %s235 = sand.u32 %s31, 1
        %s236 = smul.addr %s235, 128
        %s237 = scalar_lea.vmem [#allocation2], %s236
        // Predicated region
        $region41: #{tpu_custom_call.1} parent=39 // pred_check
          %p238 = pneg %p44
        $region42: #{tpu_custom_call.1} parent=39 // pred_check_branch
          %240 = sbr.rel (%p238) target = $region44
        $region43: #{tpu_custom_call.1} parent=39 // pred_region
          %241 = dma.done %s234, 2048
        $region44: #{tpu_custom_call.1} parent=39 // pred_fallthru
          _
        // Predicated region
        $region45: #{tpu_custom_call.1} parent=39 // pred_check
          %p242 = pneg %p65
        $region46: #{tpu_custom_call.1} parent=39 // pred_check_branch
          %244 = sbr.rel (%p242) target = $region48
        $region47: #{tpu_custom_call.1} parent=39 // pred_region
          %245 = dma.done [#allocation6], 1024
        $region48: #{tpu_custom_call.1} parent=39 // pred_fallthru
          _
        // Predicated region
        $region49: #{tpu_custom_call.1} parent=39 // pred_check
          %p246 = pneg %p107
        $region50: #{tpu_custom_call.1} parent=39 // pred_check_branch
          %248 = sbr.rel (%p246) target = $region52
        $region51: #{tpu_custom_call.1} parent=39 // pred_region
          %249 = dma.done [#allocation6], 1024
        $region52: #{tpu_custom_call.1} parent=39 // pred_fallthru
          _
        %s250 = sand.u32 %s31, 1
        %s251 = scalar_lea.sflag [#allocation3], %s250
        %s252 = sand.u32 %s31, 1
        %s253 = smul.addr %s252, 128
        %s254 = scalar_lea.vmem [#allocation2], %s253
        %p255 = pneg %p44
        %p256 = pneg %p41
        %p257 = pneg %p65
        %p258 = pneg %p62
        %p259 = pneg %p86
        %p260 = pneg %p83
        %p261 = pneg %p107
        %p262 = pneg %p104
        %p263 = pneg %p128
        %p264 = pneg %p125
        %p265 = pneg %p154
        %p266 = pneg %p151
        %s267 = sand.u32 %s141, 1
        %s268 = scalar_lea.sflag [#allocation4], %s267
        %s269 = sand.u32 %s141, 1
        %s270 = smul.addr %s269, 128
        %s271 = scalar_lea.vmem [#allocation8], %s270
        %s272 = smul.u32 16, %s23
        %s273 = smul.u32 16, %s23
        %v275 = vld [vmem:[%s237] sm:$0xff]
        %v276 = vld [vmem:[%s237 + $0x8] sm:$0xff]
        %v277 = vld [vmem:[%s237 + $0x10] sm:$0xff]
        %v278 = vld [vmem:[%s237 + $0x18] sm:$0xff]
        %v279 = vld [vmem:[%s237 + $0x20] sm:$0xff]
        %v280 = vld [vmem:[%s237 + $0x28] sm:$0xff]
        %v281 = vld [vmem:[%s237 + $0x30] sm:$0xff]
        %v282 = vld [vmem:[%s237 + $0x38] sm:$0xff]
        %v283 = vld [vmem:[%s237 + $0x40] sm:$0xff]
        %v284 = vld [vmem:[%s237 + $0x48] sm:$0xff]
        %v285 = vld [vmem:[%s237 + $0x50] sm:$0xff]
        %v286 = vld [vmem:[%s237 + $0x58] sm:$0xff]
        %v287 = vld [vmem:[%s237 + $0x60] sm:$0xff]
        %v288 = vld [vmem:[%s237 + $0x68] sm:$0xff]
        %v289 = vld [vmem:[%s237 + $0x70] sm:$0xff]
        %v290 = vld [vmem:[%s237 + $0x78] sm:$0xff]
        %v291 = vpack.c.bf16 %v276, %v275
        %v292 = vpack.c.bf16 %v278, %v277
        %v293 = vpack.c.bf16 %v280, %v279
        %v294 = vpack.c.bf16 %v282, %v281
        %v295 = vpack.c.bf16 %v284, %v283
        %v296 = vpack.c.bf16 %v286, %v285
        %v297 = vpack.c.bf16 %v288, %v287
        %v298 = vpack.c.bf16 %v290, %v289
        %v299 = vld [vmem:[#allocation5] sm:$0xf]
        %v300 = vld [vmem:[#allocation5 + $0x4] sm:$0xf]
        %v301 = vld [vmem:[#allocation5 + $0x8] sm:$0xf]
        %v302 = vld [vmem:[#allocation5 + $0xc] sm:$0xf]
        %v303 = vld [vmem:[#allocation5 + $0x10] sm:$0xf]
        %v304 = vld [vmem:[#allocation5 + $0x14] sm:$0xf]
        %v305 = vld [vmem:[#allocation5 + $0x18] sm:$0xf]
        %v306 = vld [vmem:[#allocation5 + $0x1c] sm:$0xf]
        %v307 = vld [vmem:[#allocation5 + $0x20] sm:$0xf]
        %v308 = vld [vmem:[#allocation5 + $0x24] sm:$0xf]
        %v309 = vld [vmem:[#allocation5 + $0x28] sm:$0xf]
        %v310 = vld [vmem:[#allocation5 + $0x2c] sm:$0xf]
        %v311 = vld [vmem:[#allocation5 + $0x30] sm:$0xf]
        %v312 = vld [vmem:[#allocation5 + $0x34] sm:$0xf]
        %v313 = vld [vmem:[#allocation5 + $0x38] sm:$0xf]
        %v314 = vld [vmem:[#allocation5 + $0x3c] sm:$0xf]
        %v315 = vld [vmem:[%s2] sm:$0x1]
        %v317 = vlaneseq
        %v318 = vshrl.u32 %v317, 7
        %v319 = vsub.s32 0, %v318
        %v320 = vrot.slane %v315, %v319
        %v338 = vunpack.c.l.b16 %v299
        %v339 = vunpack.c.l.b16 %v300
        %v340 = vunpack.c.l.b16 %v301
        %v341 = vunpack.c.l.b16 %v302
        %v342 = vunpack.c.l.b16 %v303
        %v343 = vunpack.c.l.b16 %v304
        %v344 = vunpack.c.l.b16 %v305
        %v345 = vunpack.c.l.b16 %v306
        %v346 = vunpack.c.l.b16 %v307
        %v347 = vunpack.c.l.b16 %v308
        %v348 = vunpack.c.l.b16 %v309
        %v349 = vunpack.c.l.b16 %v310
        %v350 = vunpack.c.l.b16 %v311
        %v351 = vunpack.c.l.b16 %v312
        %v352 = vunpack.c.l.b16 %v313
        %v353 = vunpack.c.l.b16 %v314
        %v354 = vpack.c.b16 %v339, %v338
        %v355 = vpack.c.b16 %v341, %v340
        %v356 = vpack.c.b16 %v343, %v342
        %v357 = vpack.c.b16 %v345, %v344
        %v358 = vpack.c.b16 %v347, %v346
        %v359 = vpack.c.b16 %v349, %v348
        %v360 = vpack.c.b16 %v351, %v350
        %v361 = vpack.c.b16 %v353, %v352
        %370 = vmatprep.subr.bf16.mxu0 0
        %371 = vmatpush1.bf16.msra.mxu0 %v361
        %372 = vmatprep.subr.bf16.mxu0 0
        %373 = vmatpush1.bf16.msra.mxu0 %v360
        %374 = vmatprep.subr.bf16.mxu0 0
        %375 = vmatpush1.bf16.msra.mxu0 %v359
        %376 = vmatprep.subr.bf16.mxu0 0
        %377 = vmatpush1.bf16.msra.mxu0 %v358
        %378 = vmatprep.subr.bf16.mxu0 0
        %379 = vmatpush1.bf16.msra.mxu0 %v357
        %380 = vmatprep.subr.bf16.mxu0 0
        %381 = vmatpush1.bf16.msra.mxu0 %v356
        %382 = vmatprep.subr.bf16.mxu0 0
        %383 = vmatpush1.bf16.msra.mxu0 %v355
        %384 = vmatprep.subr.bf16.mxu0 0
        %385 = vmatpush1.bf16.msra.mxu0 %v354
        %386 = vmatprep.subr.bf16.mxu0 0
        %387 = vmatpush2.bf16.msra.mxu0 0
        %388 = vmatprep.subr.bf16.mxu0 0
        %389 = vmatpush2.bf16.msra.mxu0 0
        %390 = vmatprep.subr.bf16.mxu0 0
        %391 = vmatpush2.bf16.msra.mxu0 0
        %392 = vmatprep.subr.bf16.mxu0 0
        %393 = vmatpush2.bf16.msra.mxu0 0
        %394 = vmatprep.subr.bf16.mxu0 0
        %395 = vmatpush2.bf16.msra.mxu0 0
        %396 = vmatprep.subr.bf16.mxu0 0
        %397 = vmatpush2.bf16.msra.mxu0 0
        %398 = vmatprep.subr.bf16.mxu0 0
        %399 = vmatpush2.bf16.msra.mxu0 0
        %400 = vmatprep.subr.bf16.mxu0 0
        %401 = vmatpush2.bf16.msra.mxu0 0
        %402 = vmatprep.mubr.bf16.mxu0 0
        %403 = vmatmul.mubr.bf16.gmra.mxu0 %v291
        %v404 = vpop.f32.mrf.mxu0
        %v405 = vadd.f32 %v320, %v404
        %v406 = vpop.f32.mrf.mxu0
        %v407 = vpop.f32.mrf.mxu0
        %v408 = vadd.f32 %v320, %v407
        %v409 = vpop.f32.mrf.mxu0
        %410 = vmatprep.mubr.bf16.mxu0 0
        %411 = vmatmul.mubr.bf16.gmra.mxu0 %v292
        %v412 = vpop.f32.mrf.mxu0
        %v413 = vadd.f32 %v320, %v412
        %v414 = vpop.f32.mrf.mxu0
        %v415 = vpop.f32.mrf.mxu0
        %v416 = vadd.f32 %v320, %v415
        %v417 = vpop.f32.mrf.mxu0
        %418 = vmatprep.mubr.bf16.mxu0 0
        %419 = vmatmul.mubr.bf16.gmra.mxu0 %v293
        %v420 = vpop.f32.mrf.mxu0
        %v421 = vadd.f32 %v320, %v420
        %v422 = vpop.f32.mrf.mxu0
        %v423 = vpop.f32.mrf.mxu0
        %v424 = vadd.f32 %v320, %v423
        %v425 = vpop.f32.mrf.mxu0
        %426 = vmatprep.mubr.bf16.mxu0 0
        %427 = vmatmul.mubr.bf16.gmra.mxu0 %v294
        %v428 = vpop.f32.mrf.mxu0
        %v429 = vadd.f32 %v320, %v428
        %v430 = vpop.f32.mrf.mxu0
        %v431 = vpop.f32.mrf.mxu0
        %v432 = vadd.f32 %v320, %v431
        %v433 = vpop.f32.mrf.mxu0
        %434 = vmatprep.mubr.bf16.mxu0 0
        %435 = vmatmul.mubr.bf16.gmra.mxu0 %v295
        %v436 = vpop.f32.mrf.mxu0
        %v437 = vadd.f32 %v320, %v436
        %v438 = vpop.f32.mrf.mxu0
        %v439 = vpop.f32.mrf.mxu0
        %v440 = vadd.f32 %v320, %v439
        %v441 = vpop.f32.mrf.mxu0
        %442 = vmatprep.mubr.bf16.mxu0 0
        %443 = vmatmul.mubr.bf16.gmra.mxu0 %v296
        %v444 = vpop.f32.mrf.mxu0
        %v445 = vadd.f32 %v320, %v444
        %v446 = vpop.f32.mrf.mxu0
        %v447 = vpop.f32.mrf.mxu0
        %v448 = vadd.f32 %v320, %v447
        %v449 = vpop.f32.mrf.mxu0
        %450 = vmatprep.mubr.bf16.mxu0 0
        %451 = vmatmul.mubr.bf16.gmra.mxu0 %v297
        %v452 = vpop.f32.mrf.mxu0
        %v453 = vadd.f32 %v320, %v452
        %v454 = vpop.f32.mrf.mxu0
        %v455 = vpop.f32.mrf.mxu0
        %v456 = vadd.f32 %v320, %v455
        %v457 = vpop.f32.mrf.mxu0
        %458 = vmatprep.mubr.bf16.mxu0 0
        %459 = vmatmul.mubr.bf16.gmra.mxu0 %v298
        %v460 = vpop.f32.mrf.mxu0
        %v461 = vadd.f32 %v320, %v460
        %v462 = vpop.f32.mrf.mxu0
        %v463 = vpop.f32.mrf.mxu0
        %v464 = vadd.f32 %v320, %v463
        %v465 = vpop.f32.mrf.mxu0
        %466 = vdwg.mxu0
        %v467 = vxor.u32 %v405, 2147483648
        %v468 = vxor.u32 %v408, 2147483648
        %v469 = vxor.u32 %v413, 2147483648
        %v470 = vxor.u32 %v416, 2147483648
        %v471 = vxor.u32 %v421, 2147483648
        %v472 = vxor.u32 %v424, 2147483648
        %v473 = vxor.u32 %v429, 2147483648
        %v474 = vxor.u32 %v432, 2147483648
        %v475 = vxor.u32 %v437, 2147483648
        %v476 = vxor.u32 %v440, 2147483648
        %v477 = vxor.u32 %v445, 2147483648
        %v478 = vxor.u32 %v448, 2147483648
        %v479 = vxor.u32 %v453, 2147483648
        %v480 = vxor.u32 %v456, 2147483648
        %v481 = vxor.u32 %v461, 2147483648
        %v482 = vxor.u32 %v464, 2147483648
        %v483 = vmul.f32 %v467, 1.442695
        %v484 = vpow.pop %v483
        %v485 = vmul.f32 %v468, 1.442695
        %v486 = vpow.pop %v485
        %v487 = vmul.f32 %v469, 1.442695
        %v488 = vpow.pop %v487
        %v489 = vmul.f32 %v470, 1.442695
        %v490 = vpow.pop %v489
        %v491 = vmul.f32 %v471, 1.442695
        %v492 = vpow.pop %v491
        %v493 = vmul.f32 %v472, 1.442695
        %v494 = vpow.pop %v493
        %v495 = vmul.f32 %v473, 1.442695
        %v496 = vpow.pop %v495
        %v497 = vmul.f32 %v474, 1.442695
        %v498 = vpow.pop %v497
        %v499 = vmul.f32 %v475, 1.442695
        %v500 = vpow.pop %v499
        %v501 = vmul.f32 %v476, 1.442695
        %v502 = vpow.pop %v501
        %v503 = vmul.f32 %v477, 1.442695
        %v504 = vpow.pop %v503
        %v505 = vmul.f32 %v478, 1.442695
        %v506 = vpow.pop %v505
        %v507 = vmul.f32 %v479, 1.442695
        %v508 = vpow.pop %v507
        %v509 = vmul.f32 %v480, 1.442695
        %v510 = vpow.pop %v509
        %v511 = vmul.f32 %v481, 1.442695
        %v512 = vpow.pop %v511
        %v513 = vmul.f32 %v482, 1.442695
        %v514 = vpow.pop %v513
        %v515 = vadd.f32 %v484, 1.0
        %v516 = vadd.f32 %v486, 1.0
        %v517 = vadd.f32 %v488, 1.0
        %v518 = vadd.f32 %v490, 1.0
        %v519 = vadd.f32 %v492, 1.0
        %v520 = vadd.f32 %v494, 1.0
        %v521 = vadd.f32 %v496, 1.0
        %v522 = vadd.f32 %v498, 1.0
        %v523 = vadd.f32 %v500, 1.0
        %v524 = vadd.f32 %v502, 1.0
        %v525 = vadd.f32 %v504, 1.0
        %v526 = vadd.f32 %v506, 1.0
        %v527 = vadd.f32 %v508, 1.0
        %v528 = vadd.f32 %v510, 1.0
        %v529 = vadd.f32 %v512, 1.0
        %v530 = vadd.f32 %v514, 1.0
        %v531 = vrcp.pop %v515
        %v532 = vmul.f32 1.0, %v531
        %v533 = vrcp.pop %v516
        %v534 = vmul.f32 1.0, %v533
        %v535 = vrcp.pop %v517
        %v536 = vmul.f32 1.0, %v535
        %v537 = vrcp.pop %v518
        %v538 = vmul.f32 1.0, %v537
        %v539 = vrcp.pop %v519
        %v540 = vmul.f32 1.0, %v539
        %v541 = vrcp.pop %v520
        %v542 = vmul.f32 1.0, %v541
        %v543 = vrcp.pop %v521
        %v544 = vmul.f32 1.0, %v543
        %v545 = vrcp.pop %v522
        %v546 = vmul.f32 1.0, %v545
        %v547 = vrcp.pop %v523
        %v548 = vmul.f32 1.0, %v547
        %v549 = vrcp.pop %v524
        %v550 = vmul.f32 1.0, %v549
        %v551 = vrcp.pop %v525
        %v552 = vmul.f32 1.0, %v551
        %v553 = vrcp.pop %v526
        %v554 = vmul.f32 1.0, %v553
        %v555 = vrcp.pop %v527
        %v556 = vmul.f32 1.0, %v555
        %v557 = vrcp.pop %v528
        %v558 = vmul.f32 1.0, %v557
        %v559 = vrcp.pop %v529
        %v560 = vmul.f32 1.0, %v559
        %v561 = vrcp.pop %v530
        %v562 = vmul.f32 1.0, %v561
        %v563 = vpack.c.bf16 %v534, %v532
        %v564 = vpack.c.bf16 %v538, %v536
        %v565 = vpack.c.bf16 %v542, %v540
        %v566 = vpack.c.bf16 %v546, %v544
        %v567 = vpack.c.bf16 %v550, %v548
        %v568 = vpack.c.bf16 %v554, %v552
        %v569 = vpack.c.bf16 %v558, %v556
        %v570 = vpack.c.bf16 %v562, %v560
        %v571 = vld [vmem:[#allocation7] sm:$0xf]
        %v572 = vld [vmem:[#allocation7 + $0x4] sm:$0xf]
        %v573 = vld [vmem:[#allocation7 + $0x8] sm:$0xf]
        %v574 = vld [vmem:[#allocation7 + $0xc] sm:$0xf]
        %v575 = vld [vmem:[#allocation7 + $0x10] sm:$0xf]
        %v576 = vld [vmem:[#allocation7 + $0x14] sm:$0xf]
        %v577 = vld [vmem:[#allocation7 + $0x18] sm:$0xf]
        %v578 = vld [vmem:[#allocation7 + $0x1c] sm:$0xf]
        %v579 = vld [vmem:[#allocation7 + $0x20] sm:$0xf]
        %v580 = vld [vmem:[#allocation7 + $0x24] sm:$0xf]
        %v581 = vld [vmem:[#allocation7 + $0x28] sm:$0xf]
        %v582 = vld [vmem:[#allocation7 + $0x2c] sm:$0xf]
        %v583 = vld [vmem:[#allocation7 + $0x30] sm:$0xf]
        %v584 = vld [vmem:[#allocation7 + $0x34] sm:$0xf]
        %v585 = vld [vmem:[#allocation7 + $0x38] sm:$0xf]
        %v586 = vld [vmem:[#allocation7 + $0x3c] sm:$0xf]
        %v587 = vld [vmem:[%s4] sm:$0x1]
        %v589 = vlaneseq
        %v590 = vshrl.u32 %v589, 7
        %v591 = vsub.s32 0, %v590
        %v592 = vrot.slane %v587, %v591
        %v610 = vunpack.c.l.b16 %v571
        %v611 = vunpack.c.l.b16 %v572
        %v612 = vunpack.c.l.b16 %v573
        %v613 = vunpack.c.l.b16 %v574
        %v614 = vunpack.c.l.b16 %v575
        %v615 = vunpack.c.l.b16 %v576
        %v616 = vunpack.c.l.b16 %v577
        %v617 = vunpack.c.l.b16 %v578
        %v618 = vunpack.c.l.b16 %v579
        %v619 = vunpack.c.l.b16 %v580
        %v620 = vunpack.c.l.b16 %v581
        %v621 = vunpack.c.l.b16 %v582
        %v622 = vunpack.c.l.b16 %v583
        %v623 = vunpack.c.l.b16 %v584
        %v624 = vunpack.c.l.b16 %v585
        %v625 = vunpack.c.l.b16 %v586
        %v626 = vpack.c.b16 %v611, %v610
        %v627 = vpack.c.b16 %v613, %v612
        %v628 = vpack.c.b16 %v615, %v614
        %v629 = vpack.c.b16 %v617, %v616
        %v630 = vpack.c.b16 %v619, %v618
        %v631 = vpack.c.b16 %v621, %v620
        %v632 = vpack.c.b16 %v623, %v622
        %v633 = vpack.c.b16 %v625, %v624
        %642 = vmatprep.subr.bf16.mxu0 0
        %643 = vmatpush1.bf16.msra.mxu0 %v633
        %644 = vmatprep.subr.bf16.mxu0 0
        %645 = vmatpush1.bf16.msra.mxu0 %v632
        %646 = vmatprep.subr.bf16.mxu0 0
        %647 = vmatpush1.bf16.msra.mxu0 %v631
        %648 = vmatprep.subr.bf16.mxu0 0
        %649 = vmatpush1.bf16.msra.mxu0 %v630
        %650 = vmatprep.subr.bf16.mxu0 0
        %651 = vmatpush1.bf16.msra.mxu0 %v629
        %652 = vmatprep.subr.bf16.mxu0 0
        %653 = vmatpush1.bf16.msra.mxu0 %v628
        %654 = vmatprep.subr.bf16.mxu0 0
        %655 = vmatpush1.bf16.msra.mxu0 %v627
        %656 = vmatprep.subr.bf16.mxu0 0
        %657 = vmatpush1.bf16.msra.mxu0 %v626
        %658 = vmatprep.subr.bf16.mxu0 0
        %659 = vmatpush2.bf16.msra.mxu0 0
        %660 = vmatprep.subr.bf16.mxu0 0
        %661 = vmatpush2.bf16.msra.mxu0 0
        %662 = vmatprep.subr.bf16.mxu0 0
        %663 = vmatpush2.bf16.msra.mxu0 0
        %664 = vmatprep.subr.bf16.mxu0 0
        %665 = vmatpush2.bf16.msra.mxu0 0
        %666 = vmatprep.subr.bf16.mxu0 0
        %667 = vmatpush2.bf16.msra.mxu0 0
        %668 = vmatprep.subr.bf16.mxu0 0
        %669 = vmatpush2.bf16.msra.mxu0 0
        %670 = vmatprep.subr.bf16.mxu0 0
        %671 = vmatpush2.bf16.msra.mxu0 0
        %672 = vmatprep.subr.bf16.mxu0 0
        %673 = vmatpush2.bf16.msra.mxu0 0
        %674 = vmatprep.mubr.bf16.mxu0 0
        %675 = vmatmul.mubr.bf16.gmra.mxu0 %v563
        %v676 = vpop.f32.mrf.mxu0
        %v677 = vadd.f32 %v592, %v676
        %v678 = vpop.f32.mrf.mxu0
        %v679 = vpop.f32.mrf.mxu0
        %v680 = vadd.f32 %v592, %v679
        %v681 = vpop.f32.mrf.mxu0
        %682 = vmatprep.mubr.bf16.mxu0 0
        %683 = vmatmul.mubr.bf16.gmra.mxu0 %v564
        %v684 = vpop.f32.mrf.mxu0
        %v685 = vadd.f32 %v592, %v684
        %v686 = vpop.f32.mrf.mxu0
        %v687 = vpop.f32.mrf.mxu0
        %v688 = vadd.f32 %v592, %v687
        %v689 = vpop.f32.mrf.mxu0
        %690 = vmatprep.mubr.bf16.mxu0 0
        %691 = vmatmul.mubr.bf16.gmra.mxu0 %v565
        %v692 = vpop.f32.mrf.mxu0
        %v693 = vadd.f32 %v592, %v692
        %v694 = vpop.f32.mrf.mxu0
        %v695 = vpop.f32.mrf.mxu0
        %v696 = vadd.f32 %v592, %v695
        %v697 = vpop.f32.mrf.mxu0
        %698 = vmatprep.mubr.bf16.mxu0 0
        %699 = vmatmul.mubr.bf16.gmra.mxu0 %v566
        %v700 = vpop.f32.mrf.mxu0
        %v701 = vadd.f32 %v592, %v700
        %v702 = vpop.f32.mrf.mxu0
        %v703 = vpop.f32.mrf.mxu0
        %v704 = vadd.f32 %v592, %v703
        %v705 = vpop.f32.mrf.mxu0
        %706 = vmatprep.mubr.bf16.mxu0 0
        %707 = vmatmul.mubr.bf16.gmra.mxu0 %v567
        %v708 = vpop.f32.mrf.mxu0
        %v709 = vadd.f32 %v592, %v708
        %v710 = vpop.f32.mrf.mxu0
        %v711 = vpop.f32.mrf.mxu0
        %v712 = vadd.f32 %v592, %v711
        %v713 = vpop.f32.mrf.mxu0
        %714 = vmatprep.mubr.bf16.mxu0 0
        %715 = vmatmul.mubr.bf16.gmra.mxu0 %v568
        %v716 = vpop.f32.mrf.mxu0
        %v717 = vadd.f32 %v592, %v716
        %v718 = vpop.f32.mrf.mxu0
        %v719 = vpop.f32.mrf.mxu0
        %v720 = vadd.f32 %v592, %v719
        %v721 = vpop.f32.mrf.mxu0
        %722 = vmatprep.mubr.bf16.mxu0 0
        %723 = vmatmul.mubr.bf16.gmra.mxu0 %v569
        %v724 = vpop.f32.mrf.mxu0
        %v725 = vadd.f32 %v592, %v724
        %v726 = vpop.f32.mrf.mxu0
        %v727 = vpop.f32.mrf.mxu0
        %v728 = vadd.f32 %v592, %v727
        %v729 = vpop.f32.mrf.mxu0
        %730 = vmatprep.mubr.bf16.mxu0 0
        %731 = vmatmul.mubr.bf16.gmra.mxu0 %v570
        %v732 = vpop.f32.mrf.mxu0
        %v733 = vadd.f32 %v592, %v732
        %v734 = vpop.f32.mrf.mxu0
        %v735 = vpop.f32.mrf.mxu0
        %v736 = vadd.f32 %v592, %v735
        %v737 = vpop.f32.mrf.mxu0
        %738 = vdwg.mxu0
        %739 = vst [vmem:[%s271] sm:$0xff] %v677
        %740 = vst [vmem:[%s271 + $0x8] sm:$0xff] %v680
        %741 = vst [vmem:[%s271 + $0x10] sm:$0xff] %v685
        %742 = vst [vmem:[%s271 + $0x18] sm:$0xff] %v688
        %743 = vst [vmem:[%s271 + $0x20] sm:$0xff] %v693
        %744 = vst [vmem:[%s271 + $0x28] sm:$0xff] %v696
        %745 = vst [vmem:[%s271 + $0x30] sm:$0xff] %v701
        %746 = vst [vmem:[%s271 + $0x38] sm:$0xff] %v704
        %747 = vst [vmem:[%s271 + $0x40] sm:$0xff] %v709
        %748 = vst [vmem:[%s271 + $0x48] sm:$0xff] %v712
        %749 = vst [vmem:[%s271 + $0x50] sm:$0xff] %v717
        %750 = vst [vmem:[%s271 + $0x58] sm:$0xff] %v720
        %751 = vst [vmem:[%s271 + $0x60] sm:$0xff] %v725
        %752 = vst [vmem:[%s271 + $0x68] sm:$0xff] %v728
        %753 = vst [vmem:[%s271 + $0x70] sm:$0xff] %v733
        %754 = vst [vmem:[%s271 + $0x78] sm:$0xff] %v736
        %s755 = sand.u32 %s141, 1
        %s756 = scalar_lea.sflag [#allocation4], %s755
        %s757 = sand.u32 %s141, 1
        %s758 = smul.addr %s757, 128
        %s759 = scalar_lea.vmem [#allocation8], %s758
        // Predicated region
        $region53: #{tpu_custom_call.1} parent=39 // pred_check
          %p760 = pneg %p151
        $region54: #{tpu_custom_call.1} parent=39 // pred_check_branch
          %762 = sbr.rel (%p760) target = $region56
        $region55: #{tpu_custom_call.1} parent=39 // pred_region
          %s763 = smul.u32 16, %s23
          %s765 = ssub.s32 2048, 2048
          %766 = vsyncadd %s756, %s765
          %s767 = smul.addr %s763, 128
          %s768 = scalar_lea.hbm %s5, %s767
          %s769 = sshll.u32 %s759, 4
          %s770 = int_to_ptr.vmem [resolvable:$true] %s769
          %775 = dma.vmem_to_hbm [thread:$0]  %s770, 2048, %s768, %s756, 128, 128, 8
        $region56: #{tpu_custom_call.1} parent=39 // pred_fallthru
          _
      $region40: #{tpu_custom_call.1} parent=5 // pred_fallthru
        _
      %p776 = scmp.le.s32.totalorder 2, %s18
      // Predicated region
      $region57: #{tpu_custom_call.1} parent=5 // pred_check
        %p777 = pneg %p776
      $region58: #{tpu_custom_call.1} parent=5 // pred_check_branch
        %779 = sbr.rel (%p777) target = $region60
      $region59: #{tpu_custom_call.1} parent=5 // pred_region
        %s780 = ssub.s32 %s18, 2
        // Predicated region
        $region61: #{tpu_custom_call.1} parent=59 // pred_check
          %p781 = pneg %p157
        $region62: #{tpu_custom_call.1} parent=59 // pred_check_branch
          %783 = sbr.rel (%p781) target = $region64
        $region63: #{tpu_custom_call.1} parent=59 // pred_region
          %s784 = sand.u32 %s142, 1
          %s785 = scalar_lea.sflag [#allocation4], %s784
          %s786 = sand.u32 %s142, 1
          %s787 = smul.addr %s786, 128
          %s788 = scalar_lea.vmem [#allocation8], %s787
          %789 = dma.done %s785, 2048
        $region64: #{tpu_custom_call.1} parent=59 // pred_fallthru
          _
      $region60: #{tpu_custom_call.1} parent=5 // pred_fallthru
        _
    $region6: #{tpu_custom_call.1} parent=1 // loop_footer
      %s22 = sadd.s32 1, %s18
    $region7: #{tpu_custom_call.1} parent=1 // loop_footer_branch
      %17 = sbr.rel target = $region3
    $region8: #{tpu_custom_call.1} parent=1 // loop_exit
      _
    %790 = vsyncpa [#allocation3], 1
    %s791 = scalar_lea.sflag [#allocation3], 1
    %792 = vsyncpa %s791, 1
    %793 = vsyncpa [#allocation6], 1
    %794 = vsyncpa [#allocation4], 1
    %s795 = scalar_lea.sflag [#allocation4], 1
    %796 = vsyncpa %s795, 1

</llo_original>
